<compile_context>
chip_gen: v6e
topology: v6e:2x2x1
jax: 0.10.0
libtpu: 0.0.40
codegen_flags: <defaults>
</compile_context>

<pallas_src>
import functools

import jax
import jax.numpy as jnp
from jax.experimental import pallas as pl
from jax.experimental.pallas import tpu as pltpu

_HAS_BUFFERED = hasattr(pl, "Buffered")


def _round_up(x: int, m: int) -> int:
    return pl.cdiv(x, m) * m


def _vmem_capacity_bytes() -> int:
    """Generation-aware VMEM capacity; conservative (v7x per-TC) fallback."""
    try:
        return int(pltpu.get_tpu_info().vmem_capacity_bytes)
    except Exception:
        return 64 << 20


def _query_head_kernel(x_ref, w1_ref, b1_ref, w2_ref, b2_ref, o_ref, acc_ref):
    """out = relu(x @ W1 + b1) @ W2 + b2 for one (batch-tile, H-tile) step."""
    h_idx = pl.program_id(1)

    @pl.when(h_idx == 0)
    def _init():
        acc_ref[...] = jnp.zeros_like(acc_ref)

    # Cast activations here (not in the wrapper): f32 is read from HBM once
    # and converted on the VPU, which has slack under the MXU.
    x = x_ref[...].astype(w1_ref.dtype)
    h = jnp.dot(x, w1_ref[...], preferred_element_type=jnp.float32)
    h = jnp.maximum(h + b1_ref[...], 0.0)                     # bias + ReLU, f32
    acc_ref[...] += jnp.dot(h.astype(w2_ref.dtype), w2_ref[...],
                            preferred_element_type=jnp.float32)

    @pl.when(h_idx == pl.num_programs(1) - 1)
    def _finalize():
        o_ref[...] = (acc_ref[...] + b2_ref[...]).astype(o_ref.dtype)


def prepare_query_head_params(w1, b1, w2, b2, *, compute_dtype=jnp.bfloat16):
    """Pad H / D_out to lane-dense multiples of 128 and cast weights once.

    Zero padding is mathematically exact (padded hidden units are relu(0)=0
    and padded W2 rows/columns are 0).  Returns (w1_p, b1_p, w2_p, b2_p).
    """
    _, H = w1.shape
    D_out = w2.shape[1]
    H_p = _round_up(H, 128)
    D_out_p = _round_up(D_out, 128)
    w1_p = jnp.pad(w1.astype(compute_dtype), ((0, 0), (0, H_p - H)))
    b1_p = jnp.pad(b1.astype(jnp.float32), (0, H_p - H)).reshape(1, H_p)
    w2_p = jnp.pad(w2.astype(compute_dtype),
                   ((0, H_p - H), (0, D_out_p - D_out)))
    b2_p = jnp.pad(b2.astype(jnp.float32),
                   (0, D_out_p - D_out)).reshape(1, D_out_p)
    return (w1_p, b1_p, w2_p, b2_p)


def _select_tiles(B, D_in, H_p, D_out_p, x_bytes, w_bytes, out_bytes,
                  tile_b, tile_h, budget):
    """Pick (TB, TH, est_footprint).  Prefer fully resident weights (TH=H_p)."""
    h_blocks = H_p // 128
    # TH must be a multiple of 128 that divides H_p exactly (no extra padding).
    th_options = [d for d in range(h_blocks, 0, -1) if h_blocks % d == 0]

    TB = min(_round_up(tile_b, 16), _round_up(B, 16))      # bf16 packs 16 rows
    # v7x has two TensorCores: give the "parallel" batch axis >= 2 steps.
    if B > 16 and pl.cdiv(B, TB) < 2:
        TB = _round_up(pl.cdiv(B, 2), 16)

    def footprint(tb, thb):
        th = thb * 128
        n_h = h_blocks // thb
        wbuf = 1 if n_h == 1 else 2            # resident weights single-buffered
        return (2 * tb * D_in * x_bytes                       # x tiles (2 bufs)
                + 2 * tb * D_out_p * out_bytes                # out tiles (2 bufs)
                + tb * D_out_p * 4                            # f32 acc scratch
                + wbuf * (D_in * th * w_bytes + th * 4
                          + th * D_out_p * w_bytes + D_out_p * 4)
                + tb * th * (4 + w_bytes))                    # f32 hidden + cast

    if tile_h is not None:                     # explicit override (debug/test)
        want = max(1, min(h_blocks, int(tile_h) // 128))
        fitting = [d for d in th_options if d <= want]
        thb = fitting[0] if fitting else th_options[-1]
        return TB, thb * 128, footprint(TB, thb)

    tb = TB
    while True:
        for thb in th_options:                 # largest TH (resident) first
            fp = footprint(tb, thb)
            if fp * 1.15 <= budget:
                return tb, thb * 128, fp
        if tb <= 16:
            break
        tb = max(16, _round_up(max(tb // 2, 16), 16))
    thb = th_options[-1]
    return 16, thb * 128, footprint(16, thb)   # best effort; compiler may spill


@functools.partial(jax.jit, static_argnames=("out_features", "tile_b", "tile_h"))
def query_head_forward(x, w1_p, b1_p, w2_p, b2_p, *, out_features,
                       tile_b=512, tile_h=None):
    """QueryHead MLP forward. x: (B, D_in); params from prepare_query_head_params."""
    B, D_in = x.shape
    H_p = w1_p.shape[1]
    D_out_p = w2_p.shape[1]
    out_dtype = x.dtype

    budget = int(0.80 * _vmem_capacity_bytes())   # leave compiler-scratch headroom
    TB, TH, fp = _select_tiles(B, D_in, H_p, D_out_p,
                               x.dtype.itemsize, w1_p.dtype.itemsize,
                               x.dtype.itemsize, tile_b, tile_h, budget)
    n_h = H_p // TH
    B_p = _round_up(B, TB)
    n_b = B_p // TB

    # Batch-row padding only; no dtype cast of x in the wrapper.
    x_p = x if B_p == B else jnp.pad(x, ((0, B_p - B), (0, 0)))

    vmem_limit = int(min(budget, max(4 * fp, 32 << 20)))

    def _weight_spec(shape, index_map):
        # Resident case: constant index_map -> DMA once; single buffer halves
        # resident-weight VMEM (important on v7x's 64 MiB/TC).
        if n_h == 1 and _HAS_BUFFERED:
            return pl.BlockSpec(shape, index_map, pipeline_mode=pl.Buffered(1))
        return pl.BlockSpec(shape, index_map)

    out_padded = pl.pallas_call(
        _query_head_kernel,
        out_shape=jax.ShapeDtypeStruct((B_p, D_out_p), out_dtype),
        grid_spec=pltpu.PrefetchScalarGridSpec(
            num_scalar_prefetch=0,
            grid=(n_b, n_h),
            in_specs=[
                pl.BlockSpec((TB, D_in), lambda i, h: (i, 0)),        # x streamed
                _weight_spec((D_in, TH), lambda i, h: (0, h)),        # W1
                _weight_spec((1, TH), lambda i, h: (0, h)),           # b1
                _weight_spec((TH, D_out_p), lambda i, h: (h, 0)),     # W2
                _weight_spec((1, D_out_p), lambda i, h: (0, 0)),      # b2
            ],
            out_specs=pl.BlockSpec((TB, D_out_p), lambda i, h: (i, 0)),
            scratch_shapes=[pltpu.VMEM((TB, D_out_p), jnp.float32)],
        ),
        compiler_params=pltpu.CompilerParams(
            dimension_semantics=("parallel", "arbitrary"),
            vmem_limit_bytes=vmem_limit,
        ),
    )(x_p, w1_p, b1_p, w2_p, b2_p)

    if B_p == B and D_out_p == out_features:
        return out_padded                      # lane-dense, no slice needed
    return out_padded[:B, :out_features]


def _reference_forward(x, w1, b1, w2, b2):
    h = jnp.maximum(x @ w1 + b1, 0.0)
    return h @ w2 + b2


if __name__ == "__main__":
    # Small shapes consistent with the module: X is (B, input_size).
    B = 8
    input_size = 32
    hidden_size = 64
    output_size = 16

    key = jax.random.PRNGKey(0)
    kx, kw1, kb1, kw2, kb2 = jax.random.split(key, 5)

    x = jax.random.normal(kx, (B, input_size), dtype=jnp.float32)
    # Deterministic parameter init (roughly nn.Linear's uniform fan-in init).
    bound1 = 1.0 / (input_size ** 0.5)
    w1 = jax.random.uniform(kw1, (input_size, hidden_size),
                            minval=-bound1, maxval=bound1, dtype=jnp.float32)
    b1 = jax.random.uniform(kb1, (hidden_size,),
                            minval=-bound1, maxval=bound1, dtype=jnp.float32)
    bound2 = 1.0 / (hidden_size ** 0.5)
    w2 = jax.random.uniform(kw2, (hidden_size, output_size),
                            minval=-bound2, maxval=bound2, dtype=jnp.float32)
    b2 = jax.random.uniform(kb2, (output_size,),
                            minval=-bound2, maxval=bound2, dtype=jnp.float32)

    # Pad/cast weights ONCE; reuse across all forward calls.
    params = prepare_query_head_params(w1, b1, w2, b2)

    # 1) Single-tile path: weights resident + single-buffered.
    out = jax.block_until_ready(
        query_head_forward(x, *params, out_features=output_size))
    ref = _reference_forward(x, w1, b1, w2, b2)
    assert out.shape == (B, output_size)
    assert jnp.allclose(out, ref, atol=2e-2, rtol=2e-2), "mismatch vs reference"

    # 2) Non-tile-multiple batch, multi-step parallel batch grid.
    B2 = 200
    x2 = jax.random.normal(jax.random.PRNGKey(1), (B2, input_size),
                           dtype=jnp.float32)
    out2 = jax.block_until_ready(
        query_head_forward(x2, *params, out_features=output_size, tile_b=64))
    ref2 = _reference_forward(x2, w1, b1, w2, b2)
    assert out2.shape == (B2, output_size)
    assert jnp.allclose(out2, ref2, atol=2e-2, rtol=2e-2), "mismatch (tiled B)"

    # 3) H-tiled accumulator fallback (forced via tile_h) — the path used when
    #    W1/W2 are too large to keep resident in VMEM (e.g. big H on v7x).
    hidden_big = 256
    kw1b, kb1b, kw2b = jax.random.split(jax.random.PRNGKey(2), 3)
    bound1b = 1.0 / (input_size ** 0.5)
    w1b = jax.random.uniform(kw1b, (input_size, hidden_big),
                             minval=-bound1b, maxval=bound1b, dtype=jnp.float32)
    b1b = jax.random.uniform(kb1b, (hidden_big,),
                             minval=-bound1b, maxval=bound1b, dtype=jnp.float32)
    bound2b = 1.0 / (hidden_big ** 0.5)
    w2b = jax.random.uniform(kw2b, (hidden_big, output_size),
                             minval=-bound2b, maxval=bound2b, dtype=jnp.float32)
    params_b = prepare_query_head_params(w1b, b1b, w2b, b2)
    out3 = jax.block_until_ready(
        query_head_forward(x2, *params_b, out_features=output_size,
                           tile_b=64, tile_h=128))
    ref3 = _reference_forward(x2, w1b, b1b, w2b, b2)
    assert out3.shape == (B2, output_size)
    assert jnp.allclose(out3, ref3, atol=2e-2, rtol=2e-2), "mismatch (tiled H)"

    print("KERNEL_OK")
</pallas_src>

<mosaic_0001>
module attributes {stable_mosaic.version = 11 : i64} {
  func.func @_query_head_kernel(%arg0: i32, %arg1: i32, %arg2: memref<16x32xf32, #tpu.memory_space<vmem>>, %arg3: memref<32x128xbf16, #tpu.memory_space<vmem>>, %arg4: memref<1x128xf32, #tpu.memory_space<vmem>>, %arg5: memref<128x128xbf16, #tpu.memory_space<vmem>>, %arg6: memref<1x128xf32, #tpu.memory_space<vmem>>, %arg7: memref<16x128xf32, #tpu.memory_space<vmem>>, %arg8: memref<16x128xf32, #tpu.memory_space<vmem>>) attributes {dimension_semantics = [#tpu.dimension_semantics<parallel>, #tpu.dimension_semantics<arbitrary>], iteration_bounds = array<i64: 1, 1>, scalar_prefetch = 0 : i64, scratch_operands = 1 : i64, tpu.core_type = #tpu.core_type<tc>, window_params = [{transform_indices = @transform_0, window_bounds = array<i64: 16, 32>}, {pipeline_mode = #tpu.pipeline_mode<synchronous>, transform_indices = @transform_1, window_bounds = array<i64: 32, 128>}, {pipeline_mode = #tpu.pipeline_mode<synchronous>, transform_indices = @transform_2, window_bounds = array<i64: 1, 128>}, {pipeline_mode = #tpu.pipeline_mode<synchronous>, transform_indices = @transform_3, window_bounds = array<i64: 128, 128>}, {pipeline_mode = #tpu.pipeline_mode<synchronous>, transform_indices = @transform_4, window_bounds = array<i64: 1, 128>}, {transform_indices = @transform_5, window_bounds = array<i64: 16, 128>}]} {
    %c0_i32 = arith.constant 0 : i32
    %0 = arith.cmpi eq, %arg1, %c0_i32 : i32
    %1 = arith.extui %0 : i1 to i32
    %c0_i32_0 = arith.constant 0 : i32
    %2 = arith.cmpi ne, %1, %c0_i32_0 : i32
    scf.if %2 {
      %cst_16 = arith.constant 0.000000e+00 : f32
      %21 = vector.broadcast %cst_16 : f32 to vector<16x128xf32>
      %c0_17 = arith.constant 0 : index
      %c0_18 = arith.constant 0 : index
      %22 = vector.load %arg8[%c0_17, %c0_18] : memref<16x128xf32, #tpu.memory_space<vmem>>, vector<16x128xf32>
      tpu.vector_store %arg8[%c0_17, %c0_18], %21 {strides = array<i32>} : memref<16x128xf32, #tpu.memory_space<vmem>>, vector<16x128xf32>,
    } else {
    }
    %c0 = arith.constant 0 : index
    %c0_1 = arith.constant 0 : index
    %3 = vector.load %arg2[%c0, %c0_1] : memref<16x32xf32, #tpu.memory_space<vmem>>, vector<16x32xf32>
    %4 = arith.truncf %3 : vector<16x32xf32> to vector<16x32xbf16>
    %c0_2 = arith.constant 0 : index
    %c0_3 = arith.constant 0 : index
    %5 = vector.load %arg3[%c0_2, %c0_3] : memref<32x128xbf16, #tpu.memory_space<vmem>>, vector<32x128xbf16>
    %cst = arith.constant dense<0.000000e+00> : vector<16x128xf32>
    %6 = tpu.matmul %4, %5, %cst {dimension_numbers = #tpu.dot_dimension_numbers<[1], [0], [0], [1], [0, 0, 1, 1], [], []>} : vector<16x32xbf16>, vector<32x128xbf16>, vector<16x128xf32> -> vector<16x128xf32>
    %c0_4 = arith.constant 0 : index
    %c0_5 = arith.constant 0 : index
    %7 = vector.load %arg4[%c0_4, %c0_5] : memref<1x128xf32, #tpu.memory_space<vmem>>, vector<1x128xf32>
    %8 = vector.broadcast %7 : vector<1x128xf32> to vector<16x128xf32>
    %9 = arith.addf %6, %8 : vector<16x128xf32>
    %cst_6 = arith.constant 0.000000e+00 : f32
    %10 = vector.broadcast %cst_6 : f32 to vector<16x128xf32>
    %11 = arith.maximumf %9, %10 : vector<16x128xf32>
    %c0_7 = arith.constant 0 : index
    %c0_8 = arith.constant 0 : index
    %12 = vector.load %arg8[%c0_7, %c0_8] : memref<16x128xf32, #tpu.memory_space<vmem>>, vector<16x128xf32>
    %13 = arith.truncf %11 : vector<16x128xf32> to vector<16x128xbf16>
    %c0_9 = arith.constant 0 : index
    %c0_10 = arith.constant 0 : index
    %14 = vector.load %arg5[%c0_9, %c0_10] : memref<128x128xbf16, #tpu.memory_space<vmem>>, vector<128x128xbf16>
    %cst_11 = arith.constant dense<0.000000e+00> : vector<16x128xf32>
    %15 = tpu.matmul %13, %14, %cst_11 {dimension_numbers = #tpu.dot_dimension_numbers<[1], [0], [0], [1], [0, 0, 1, 1], [], []>} : vector<16x128xbf16>, vector<128x128xbf16>, vector<16x128xf32> -> vector<16x128xf32>
    %16 = arith.addf %12, %15 : vector<16x128xf32>
    %c0_12 = arith.constant 0 : index
    %c0_13 = arith.constant 0 : index
    %17 = vector.load %arg8[%c0_12, %c0_13] : memref<16x128xf32, #tpu.memory_space<vmem>>, vector<16x128xf32>
    tpu.vector_store %arg8[%c0_12, %c0_13], %16 {strides = array<i32>} : memref<16x128xf32, #tpu.memory_space<vmem>>, vector<16x128xf32>,
    %c0_i32_14 = arith.constant 0 : i32
    %18 = arith.cmpi eq, %arg1, %c0_i32_14 : i32
    %19 = arith.extui %18 : i1 to i32
    %c0_i32_15 = arith.constant 0 : i32
    %20 = arith.cmpi ne, %19, %c0_i32_15 : i32
    scf.if %20 {
      %c0_16 = arith.constant 0 : index
      %c0_17 = arith.constant 0 : index
      %21 = vector.load %arg8[%c0_16, %c0_17] : memref<16x128xf32, #tpu.memory_space<vmem>>, vector<16x128xf32>
      %c0_18 = arith.constant 0 : index
      %c0_19 = arith.constant 0 : index
      %22 = vector.load %arg6[%c0_18, %c0_19] : memref<1x128xf32, #tpu.memory_space<vmem>>, vector<1x128xf32>
      %23 = vector.broadcast %22 : vector<1x128xf32> to vector<16x128xf32>
      %24 = arith.addf %21, %23 : vector<16x128xf32>
      %c0_20 = arith.constant 0 : index
      %c0_21 = arith.constant 0 : index
      %25 = vector.load %arg7[%c0_20, %c0_21] : memref<16x128xf32, #tpu.memory_space<vmem>>, vector<16x128xf32>
      tpu.vector_store %arg7[%c0_20, %c0_21], %24 {strides = array<i32>} : memref<16x128xf32, #tpu.memory_space<vmem>>, vector<16x128xf32>,
    } else {
    }
    return
  }
  func.func @transform_0(%arg0: i32, %arg1: i32) -> (i32, i32) {
    %c0_i32 = arith.constant 0 : i32
    %c0_i32_0 = arith.constant 0 : i32
    return %arg0, %c0_i32 : i32, i32
  }
  func.func @transform_1(%arg0: i32, %arg1: i32) -> (i32, i32) {
    %c0_i32 = arith.constant 0 : i32
    %c0_i32_0 = arith.constant 0 : i32
    return %c0_i32, %arg1 : i32, i32
  }
  func.func @transform_2(%arg0: i32, %arg1: i32) -> (i32, i32) {
    %c0_i32 = arith.constant 0 : i32
    %c0_i32_0 = arith.constant 0 : i32
    return %c0_i32, %arg1 : i32, i32
  }
  func.func @transform_3(%arg0: i32, %arg1: i32) -> (i32, i32) {
    %c0_i32 = arith.constant 0 : i32
    %c0_i32_0 = arith.constant 0 : i32
    return %arg1, %c0_i32 : i32, i32
  }
  func.func @transform_4(%arg0: i32, %arg1: i32) -> (i32, i32) {
    %c0_i32 = arith.constant 0 : i32
    %c0_i32_0 = arith.constant 0 : i32
    %c0_i32_1 = arith.constant 0 : i32
    return %c0_i32, %c0_i32_0 : i32, i32
  }
  func.func @transform_5(%arg0: i32, %arg1: i32) -> (i32, i32) {
    %c0_i32 = arith.constant 0 : i32
    %c0_i32_0 = arith.constant 0 : i32
    return %arg0, %c0_i32 : i32, i32
  }
}

</mosaic_0001>

<llo_original>
// kernel: query_head_forward.1
$region0: #{query_head_forward.1}
  #allocation0 [shape = 'u32[]', space=smem, size = 0x4, offset = 0x4, fixed_abs, tag = 'smem constant byte address 0x4 - core index']
  #allocation1 [shape = 'u32[144,128]{1,0:T(1,128)}', space=vmem, size = 0x12000, scoped, tag = 'internal scratch']
  #allocation2 [shape = 'f32[16,128]{1,0:T(8,128)}', space=vmem, size = 0x2000, scoped, tag = 'scratch operand']
  %s0 = inlined_call_operand.vmem [shape: f32[16,32], index: 0, kind: input, shape index: {}]
  %s1 = inlined_call_operand.vmem [shape: bf16[32,128], index: 1, kind: input, shape index: {}]
  %s2 = inlined_call_operand.vmem [shape: f32[1,128], index: 2, kind: input, shape index: {}]
  %s3 = inlined_call_operand.hbm [shape: bf16[128,128], index: 3, kind: input, shape index: {}]
  %s4 = inlined_call_operand.vmem [shape: f32[1,128], index: 4, kind: input, shape index: {}]
  %s5 = inlined_call_operand.vmem [shape: f32[16,128], index: 5, kind: output, shape index: {}]
  %s6 = sld [smem:[#allocation0]]
  $region42: #{query_head_forward.1} parent=0
    _
  %s8 = ssub.s32 1, %s6
  %s9 = scalar_select 0, %s8, %s6
  $region1: #{query_head_forward.1} parent=0
    #allocation3 [shape = 'u8[32768]{0}', space=vmem, size = 0x8000, scoped, tag = 'input window, operand 3, single buffered']
    #allocation4 [shape = 's32[1]{0}', space=sflag, size = 0x4, scoped, tag = 'scoped memory for query_head_forward.1']
    %10 = vsyncpa [#allocation4], 0
    // Predicated region
    $region2: #{query_head_forward.1} parent=1 // pred_check
      _
    $region3: #{query_head_forward.1} parent=1 // pred_check_branch
      %12 = sbr.rel (0) target = $region5
    $region4: #{query_head_forward.1} parent=1 // pred_region
      _
    $region5: #{query_head_forward.1} parent=1 // pred_fallthru
      _
    // Predicated region
    $region6: #{query_head_forward.1} parent=1 // pred_check
      _
    $region7: #{query_head_forward.1} parent=1 // pred_check_branch
      %14 = sbr.rel (0) target = $region9
    $region8: #{query_head_forward.1} parent=1 // pred_region
      _
    $region9: #{query_head_forward.1} parent=1 // pred_fallthru
      _
    // Predicated region
    $region10: #{query_head_forward.1} parent=1 // pred_check
      _
    $region11: #{query_head_forward.1} parent=1 // pred_check_branch
      %16 = sbr.rel (0) target = $region13
    $region12: #{query_head_forward.1} parent=1 // pred_region
      _
    $region13: #{query_head_forward.1} parent=1 // pred_fallthru
      _
    // Predicated region
    $region14: #{query_head_forward.1} parent=1 // pred_check
      _
    $region15: #{query_head_forward.1} parent=1 // pred_check_branch
      %18 = sbr.rel (0) target = $region17
    $region16: #{query_head_forward.1} parent=1 // pred_region
      %s20 = ssub.s32 1024, 1024
      %21 = vsyncadd [#allocation4], %s20
      %s22 = sshll.u32 [#allocation3], 4
      %s23 = int_to_ptr.vmem [resolvable:$true] %s22
      %28 = dma.hbm_to_vmem [thread:$0]  %s3, 1024, %s23, [#allocation4], 64, 64, 4
    $region17: #{query_head_forward.1} parent=1 // pred_fallthru
      _
    // Predicated region
    $region18: #{query_head_forward.1} parent=1 // pred_check
      _
    $region19: #{query_head_forward.1} parent=1 // pred_check_branch
      %30 = sbr.rel (0) target = $region21
    $region20: #{query_head_forward.1} parent=1 // pred_region
      _
    $region21: #{query_head_forward.1} parent=1 // pred_fallthru
      _
    // Predicated region
    $region22: #{query_head_forward.1} parent=1 // pred_check
      _
    $region23: #{query_head_forward.1} parent=1 // pred_check_branch
      %32 = sbr.rel (0) target = $region25
    $region24: #{query_head_forward.1} parent=1 // pred_region
      %33 = dma.done [#allocation4], 1024
    $region25: #{query_head_forward.1} parent=1 // pred_fallthru
      _
    %p35 = scmp.eq.s32.totalorder 0, 0
    // Predicated region
    $region26: #{query_head_forward.1} parent=1 // pred_check
      %p36 = pneg %p35
    $region27: #{query_head_forward.1} parent=1 // pred_check_branch
      %38 = sbr.rel (%p36) target = $region29
    $region28: #{query_head_forward.1} parent=1 // pred_region
      %39 = vst [vmem:[#allocation2] sm:$0xff] 0.0
      %40 = vst [vmem:[#allocation2 + $0x8] sm:$0xff] 0.0
    $region29: #{query_head_forward.1} parent=1 // pred_fallthru
      _
    %v41 = vld [vmem:[%s0] sm:$0xff]
    %v42 = vld [vmem:[%s0 + $0x8] sm:$0xff]
    %v43 = vpack.c.bf16 %v42, %v41
    %v44 = vld [vmem:[%s1] sm:$0xf]
    %v45 = vld [vmem:[%s1 + $0x4] sm:$0xf]
    %v46 = vld [vmem:[%s1 + $0x8] sm:$0xf]
    %v47 = vld [vmem:[%s1 + $0xc] sm:$0xf]
    %v48 = vld [vmem:[%s2] sm:$0x1]
    %v50 = vlaneseq
    %v51 = vshrl.u32 %v50, 7
    %v52 = vsub.s32 0, %v51
    %v53 = vrot.slane %v48, %v52
    %v59 = vunpack.c.l.b16 %v44
    %v60 = vunpack.c.l.b16 %v45
    %v61 = vunpack.c.l.b16 %v46
    %v62 = vunpack.c.l.b16 %v47
    %v63 = vpack.c.b16 %v60, %v59
    %v64 = vpack.c.b16 %v62, %v61
    %vm67 = vcmask 261120
    %v69 = vsel %vm67, %v43, 0
    %71 = vmatprep.subr.bf16.mxu0 0
    %72 = vmatpush1.bf16.msra.mxu0 0
    %73 = vmatprep.subr.bf16.mxu0 0
    %74 = vmatpush1.bf16.msra.mxu0 0
    %75 = vmatprep.subr.bf16.mxu0 0
    %76 = vmatpush1.bf16.msra.mxu0 0
    %77 = vmatprep.subr.bf16.mxu0 0
    %78 = vmatpush1.bf16.msra.mxu0 0
    %79 = vmatprep.subr.bf16.mxu0 0
    %80 = vmatpush1.bf16.msra.mxu0 0
    %81 = vmatprep.subr.bf16.mxu0 0
    %82 = vmatpush1.bf16.msra.mxu0 0
    %83 = vmatprep.subr.bf16.mxu0 0
    %84 = vmatpush1.bf16.msra.mxu0 %v64
    %85 = vmatprep.subr.bf16.mxu0 0
    %86 = vmatpush1.bf16.msra.mxu0 %v63
    %87 = vmatprep.subr.bf16.mxu0 0
    %88 = vmatpush2.bf16.msra.mxu0 0
    %89 = vmatprep.subr.bf16.mxu0 0
    %90 = vmatpush2.bf16.msra.mxu0 0
    %91 = vmatprep.subr.bf16.mxu0 0
    %92 = vmatpush2.bf16.msra.mxu0 0
    %93 = vmatprep.subr.bf16.mxu0 0
    %94 = vmatpush2.bf16.msra.mxu0 0
    %95 = vmatprep.subr.bf16.mxu0 0
    %96 = vmatpush2.bf16.msra.mxu0 0
    %97 = vmatprep.subr.bf16.mxu0 0
    %98 = vmatpush2.bf16.msra.mxu0 0
    %99 = vmatprep.subr.bf16.mxu0 0
    %100 = vmatpush2.bf16.msra.mxu0 0
    %101 = vmatprep.subr.bf16.mxu0 0
    %102 = vmatpush2.bf16.msra.mxu0 0
    %103 = vmatprep.mubr.bf16.mxu0 0
    %104 = vmatmul.mubr.bf16.gmra.mxu0 %v69
    %v105 = vpop.f32.mrf.mxu0
    %v106 = vadd.f32 %v53, %v105
    %v107 = vpop.f32.mrf.mxu0
    %v108 = vpop.f32.mrf.mxu0
    %v109 = vadd.f32 %v53, %v108
    %v110 = vpop.f32.mrf.mxu0
    %111 = vdwg.mxu0
    %v112 = vmax.f32 %v106, 0.0
    %v113 = vmax.f32 %v109, 0.0
    %v114 = vld [vmem:[#allocation2] sm:$0xff]
    %v115 = vld [vmem:[#allocation2 + $0x8] sm:$0xff]
    %v116 = vpack.c.bf16 %v113, %v112
    %v117 = vld [vmem:[#allocation3] sm:$0xf]
    %v118 = vld [vmem:[#allocation3 + $0x4] sm:$0xf]
    %v119 = vld [vmem:[#allocation3 + $0x8] sm:$0xf]
    %v120 = vld [vmem:[#allocation3 + $0xc] sm:$0xf]
    %v121 = vld [vmem:[#allocation3 + $0x10] sm:$0xf]
    %v122 = vld [vmem:[#allocation3 + $0x14] sm:$0xf]
    %v123 = vld [vmem:[#allocation3 + $0x18] sm:$0xf]
    %v124 = vld [vmem:[#allocation3 + $0x1c] sm:$0xf]
    %v125 = vld [vmem:[#allocation3 + $0x20] sm:$0xf]
    %v126 = vld [vmem:[#allocation3 + $0x24] sm:$0xf]
    %v127 = vld [vmem:[#allocation3 + $0x28] sm:$0xf]
    %v128 = vld [vmem:[#allocation3 + $0x2c] sm:$0xf]
    %v129 = vld [vmem:[#allocation3 + $0x30] sm:$0xf]
    %v130 = vld [vmem:[#allocation3 + $0x34] sm:$0xf]
    %v131 = vld [vmem:[#allocation3 + $0x38] sm:$0xf]
    %v132 = vld [vmem:[#allocation3 + $0x3c] sm:$0xf]
    %v149 = vunpack.c.l.b16 %v117
    %v150 = vunpack.c.l.b16 %v118
    %v151 = vunpack.c.l.b16 %v119
    %v152 = vunpack.c.l.b16 %v120
    %v153 = vunpack.c.l.b16 %v121
    %v154 = vunpack.c.l.b16 %v122
    %v155 = vunpack.c.l.b16 %v123
    %v156 = vunpack.c.l.b16 %v124
    %v157 = vunpack.c.l.b16 %v125
    %v158 = vunpack.c.l.b16 %v126
    %v159 = vunpack.c.l.b16 %v127
    %v160 = vunpack.c.l.b16 %v128
    %v161 = vunpack.c.l.b16 %v129
    %v162 = vunpack.c.l.b16 %v130
    %v163 = vunpack.c.l.b16 %v131
    %v164 = vunpack.c.l.b16 %v132
    %v165 = vpack.c.b16 %v150, %v149
    %v166 = vpack.c.b16 %v152, %v151
    %v167 = vpack.c.b16 %v154, %v153
    %v168 = vpack.c.b16 %v156, %v155
    %v169 = vpack.c.b16 %v158, %v157
    %v170 = vpack.c.b16 %v160, %v159
    %v171 = vpack.c.b16 %v162, %v161
    %v172 = vpack.c.b16 %v164, %v163
    %181 = vmatprep.subr.bf16.mxu0 0
    %182 = vmatpush1.bf16.msra.mxu0 %v172
    %183 = vmatprep.subr.bf16.mxu0 0
    %184 = vmatpush1.bf16.msra.mxu0 %v171
    %185 = vmatprep.subr.bf16.mxu0 0
    %186 = vmatpush1.bf16.msra.mxu0 %v170
    %187 = vmatprep.subr.bf16.mxu0 0
    %188 = vmatpush1.bf16.msra.mxu0 %v169
    %189 = vmatprep.subr.bf16.mxu0 0
    %190 = vmatpush1.bf16.msra.mxu0 %v168
    %191 = vmatprep.subr.bf16.mxu0 0
    %192 = vmatpush1.bf16.msra.mxu0 %v167
    %193 = vmatprep.subr.bf16.mxu0 0
    %194 = vmatpush1.bf16.msra.mxu0 %v166
    %195 = vmatprep.subr.bf16.mxu0 0
    %196 = vmatpush1.bf16.msra.mxu0 %v165
    %197 = vmatprep.subr.bf16.mxu0 0
    %198 = vmatpush2.bf16.msra.mxu0 0
    %199 = vmatprep.subr.bf16.mxu0 0
    %200 = vmatpush2.bf16.msra.mxu0 0
    %201 = vmatprep.subr.bf16.mxu0 0
    %202 = vmatpush2.bf16.msra.mxu0 0
    %203 = vmatprep.subr.bf16.mxu0 0
    %204 = vmatpush2.bf16.msra.mxu0 0
    %205 = vmatprep.subr.bf16.mxu0 0
    %206 = vmatpush2.bf16.msra.mxu0 0
    %207 = vmatprep.subr.bf16.mxu0 0
    %208 = vmatpush2.bf16.msra.mxu0 0
    %209 = vmatprep.subr.bf16.mxu0 0
    %210 = vmatpush2.bf16.msra.mxu0 0
    %211 = vmatprep.subr.bf16.mxu0 0
    %212 = vmatpush2.bf16.msra.mxu0 0
    %213 = vmatprep.mubr.bf16.mxu0 0
    %214 = vmatmul.mubr.bf16.gmra.mxu0 %v116
    %v215 = vpop.f32.mrf.mxu0
    %v216 = vadd.f32 0.0, %v215
    %v217 = vpop.f32.mrf.mxu0
    %v218 = vpop.f32.mrf.mxu0
    %v219 = vadd.f32 0.0, %v218
    %v220 = vpop.f32.mrf.mxu0
    %221 = vdwg.mxu0
    %v222 = vadd.f32 %v114, %v216
    %v223 = vadd.f32 %v115, %v219
    %224 = vst [vmem:[#allocation2] sm:$0xff] %v222
    %225 = vst [vmem:[#allocation2 + $0x8] sm:$0xff] %v223
    // Predicated region
    $region30: #{query_head_forward.1} parent=1 // pred_check
      %p226 = pneg %p35
    $region31: #{query_head_forward.1} parent=1 // pred_check_branch
      %228 = sbr.rel (%p226) target = $region33
    $region32: #{query_head_forward.1} parent=1 // pred_region
      %v229 = vld [vmem:[#allocation2] sm:$0xff]
      %v230 = vld [vmem:[#allocation2 + $0x8] sm:$0xff]
      %v231 = vld [vmem:[%s4] sm:$0x1]
      %v233 = vlaneseq
      %v234 = vshrl.u32 %v233, 7
      %v235 = vsub.s32 0, %v234
      %v236 = vrot.slane %v231, %v235
      %v238 = vadd.f32 %v229, %v236
      %v239 = vadd.f32 %v230, %v236
      %240 = vst [vmem:[%s5] sm:$0xff] %v238
      %241 = vst [vmem:[%s5 + $0x8] sm:$0xff] %v239
    $region33: #{query_head_forward.1} parent=1 // pred_fallthru
      _
    // Predicated region
    $region34: #{query_head_forward.1} parent=1 // pred_check
      _
    $region35: #{query_head_forward.1} parent=1 // pred_check_branch
      %243 = sbr.rel (0) target = $region37
    $region36: #{query_head_forward.1} parent=1 // pred_region
      _
    $region37: #{query_head_forward.1} parent=1 // pred_fallthru
      _
    // Predicated region
    $region38: #{query_head_forward.1} parent=1 // pred_check
      _
    $region39: #{query_head_forward.1} parent=1 // pred_check_branch
      %245 = sbr.rel (0) target = $region41
    $region40: #{query_head_forward.1} parent=1 // pred_region
      _
    $region41: #{query_head_forward.1} parent=1 // pred_fallthru
      _
    %246 = vsyncpa [#allocation4], 1

</llo_original>
